<compile_context>
chip_gen: v6e
topology: v6e:2x2x1
jax: 0.10.0
libtpu: 0.0.40
codegen_flags: <defaults>
</compile_context>

<pallas_src>
import functools

import jax
import jax.numpy as jnp
import numpy as np
from jax.experimental import pallas as pl
from jax.experimental.pallas import tpu as pltpu

_B_BLK = 8  # f32 sublane count: batch rows processed per grid step


def _round_up(x, m):
    return (x + m - 1) // m * m


@functools.lru_cache(maxsize=1)
def _vmem_capacity_bytes():
    """Per-TensorCore VMEM capacity (falls back to the v7x minimum)."""
    try:
        info = pltpu.get_tpu_info()
        for attr in ("vmem_capacity_bytes", "vmem_bytes", "vmem_size_bytes"):
            v = getattr(info, attr, None)
            if v:
                return int(v)
    except Exception:
        pass
    return 64 * 2 ** 20  # conservative: v7x per-TC VMEM


# ----------------------------------------------------------------------------
# Fused Pallas kernel
# ----------------------------------------------------------------------------
def _clip_fwd_kernel(scalars_ref,      # SMEM (2,)                 [logit_scale, 1/P]
                     patches_ref,      # VMEM (8, tile_p, Dp_pad)  bf16 (streamed)
                     w_patch_ref,      # VMEM (Dp_pad, W_pad)      f32  (resident)
                     b_patch_ref,      # VMEM (1, W_pad)           f32  (resident)
                     w_proj_ref,       # VMEM (W_pad, D_pad)       f32  (resident)
                     txt_t_ref,        # VMEM (D_pad, T_pad)       f32  (resident,
                                       #      pre-normalized, pre-transposed)
                     feat_ref,         # VMEM (8, D_pad)           f32  out
                     logits_ref,       # VMEM (8, T_pad)           f32  out
                     acc_ref):         # VMEM (8, Dp_pad)          f32  scratch
    t = pl.program_id(1)

    @pl.when(t == 0)
    def _init():
        acc_ref[...] = jnp.zeros_like(acc_ref)

    # Mean pooling is linear: stream the bf16 patch rows and accumulate their
    # f32 row-sum; the (tiny) patch-embedding matmul is deferred to the final
    # tile.  Padded patch rows / feature columns are zero, so they do not
    # perturb the sum.
    acc_ref[...] += jnp.sum(patches_ref[...].astype(jnp.float32), axis=1)

    @pl.when(t == pl.num_programs(1) - 1)
    def _finalize():
        scale = scalars_ref[0]
        inv_p = scalars_ref[1]

        # mean over patches, then the (8, Dp)@(Dp, W) embedding matmul + bias
        # (identical math to mean(patches @ W_patch) + bias).
        pooled_patches = acc_ref[...] * inv_p                       # (8, Dp) f32
        pooled = jnp.dot(pooled_patches, w_patch_ref[...],
                         preferred_element_type=jnp.float32) + b_patch_ref[...]
        feat = jnp.dot(pooled, w_proj_ref[...],
                       preferred_element_type=jnp.float32)          # (8, D) f32
        feat_ref[...] = feat

        # F.normalize(x, dim=-1): x / max(||x||, 1e-12) == x * rsqrt(max(x.x, 1e-24))
        img_n = feat * jax.lax.rsqrt(
            jnp.maximum(jnp.sum(feat * feat, axis=-1, keepdims=True), 1e-24))

        # Text is already L2-normalized and laid out as (D, T): plain MXU dot.
        logits_ref[...] = scale * jnp.dot(img_n, txt_t_ref[...],
                                          preferred_element_type=jnp.float32)


# ----------------------------------------------------------------------------
# Wrappers (glue in plain JAX, compute in Pallas)
# ----------------------------------------------------------------------------
def _patchify(image, patch):
    # image: (B, C, H, W) NCHW  ->  (B, P, C*patch*patch)
    # TODO(synk): accepting NHWC input would remove this transpose's HBM
    # round-trip in the XLA prologue.
    B, C, H, W = image.shape
    gh, gw = H // patch, W // patch
    x = image.reshape(B, C, gh, patch, gw, patch)
    x = jnp.transpose(x, (0, 2, 4, 1, 3, 5))          # (B, gh, gw, C, p, p)
    return x.reshape(B, gh * gw, C * patch * patch)


def _l2_normalize(x):
    return x / jnp.maximum(jnp.linalg.norm(x, axis=-1, keepdims=True), 1e-12)


@functools.partial(jax.jit, static_argnames=("patch",))
def _clip_pallas_forward(image, w_patch, b_patch, w_proj, txt, logit_scale, *,
                         patch):
    """Returns (image_feature (B, D) f32, logits (B, T) f32)."""
    Dp, Wd = w_patch.shape
    D = w_proj.shape[1]
    T = txt.shape[0]
    B = image.shape[0]

    patches = _patchify(image, patch)                 # (B, P, Dp) f32
    P = patches.shape[1]

    # Padded / tiled sizes: lane-dense (128) last dims; batch blocked by 8
    # (f32 sublanes) so the epilogue matmuls / stores use full vregs.
    Dp_pad = _round_up(Dp, 128)
    W_pad = _round_up(Wd, 128)
    D_pad = _round_up(D, 128)
    T_pad = _round_up(T, 128)
    B_pad = _round_up(B, _B_BLK)

    vmem_cap = _vmem_capacity_bytes()
    # Patch-row tile: as large as comfortably fits (per-step DMA amortizes the
    # ~0.35us grid-step overhead).  Budget: double-buffered bf16 block plus
    # f32 reduce headroom kept under half the generation's VMEM.
    tile_p = 1024
    while tile_p > 16 and _B_BLK * tile_p * Dp_pad * (2 * 2 + 4) > vmem_cap // 2:
        tile_p //= 2
    tile_p = min(tile_p, _round_up(P, 16))            # bf16 sublane packing
    P_pad = _round_up(P, tile_p)
    n_tiles = P_pad // tile_p

    patches = jnp.pad(patches,
                      ((0, B_pad - B), (0, P_pad - P), (0, Dp_pad - Dp)))
    patches = patches.astype(jnp.bfloat16)
    w_patch_p = jnp.pad(w_patch.astype(jnp.float32),
                        ((0, Dp_pad - Dp), (0, W_pad - Wd)))
    b_patch_p = jnp.pad(b_patch.reshape(1, -1).astype(jnp.float32),
                        ((0, 0), (0, W_pad - Wd)))
    w_proj_p = jnp.pad(w_proj.astype(jnp.float32),
                       ((0, W_pad - Wd), (0, D_pad - D)))
    # Hoist text normalization + transpose out of the kernel: done once here
    # instead of once per batch block inside the epilogue.
    txt_t = jnp.pad(_l2_normalize(txt.astype(jnp.float32)).T,
                    ((0, D_pad - D), (0, T_pad - T)))
    scalars = jnp.stack([jnp.asarray(logit_scale, jnp.float32).reshape(()),
                         jnp.float32(1.0 / P)])

    # Explicit VMEM budget, clamped per-generation (v7x only has 64 MiB/TC).
    est = (2 * _B_BLK * tile_p * Dp_pad * 2      # patches (bf16, double-buffered)
           + _B_BLK * tile_p * Dp_pad * 4        # f32 reduce intermediate headroom
           + 2 * Dp_pad * W_pad * 4              # w_patch (f32)
           + 2 * W_pad * 4                       # b_patch
           + 2 * W_pad * D_pad * 4               # w_proj
           + 2 * D_pad * T_pad * 4               # txt (pre-normalized)
           + 2 * _B_BLK * (D_pad + T_pad) * 4    # outputs
           + _B_BLK * Dp_pad * 4)                # accumulator scratch
    vmem_limit = int(min(max(2 * est, 16 * 2 ** 20), (3 * vmem_cap) // 4))

    cost = pl.CostEstimate(
        flops=int(2 * B_pad * P_pad * Dp_pad
                  + 2 * B_pad * (Dp_pad * W_pad + W_pad * D_pad + D_pad * T_pad)),
        transcendentals=int(B_pad),
        bytes_accessed=int(B_pad * P_pad * Dp_pad * 2
                           + (Dp_pad * W_pad + W_pad + W_pad * D_pad
                              + D_pad * T_pad) * 4
                           + B_pad * (D_pad + T_pad) * 4))

    # TODO(synk): at batch <= 8 the "parallel" grid axis has extent 1, so one
    # of v7x's two TensorCores idles; splitting the patch-tile axis across
    # cores would need per-core partial accumulators combined at the end.
    feat, logits = pl.pallas_call(
        _clip_fwd_kernel,
        out_shape=(jax.ShapeDtypeStruct((B_pad, D_pad), jnp.float32),
                   jax.ShapeDtypeStruct((B_pad, T_pad), jnp.float32)),
        grid=(B_pad // _B_BLK, n_tiles),
        in_specs=[
            pl.BlockSpec(memory_space=pltpu.MemorySpace.SMEM),            # scalars
            pl.BlockSpec((_B_BLK, tile_p, Dp_pad), lambda b, t: (b, t, 0)),
            pl.BlockSpec((Dp_pad, W_pad), lambda b, t: (0, 0)),           # resident
            pl.BlockSpec((1, W_pad), lambda b, t: (0, 0)),                # resident
            pl.BlockSpec((W_pad, D_pad), lambda b, t: (0, 0)),            # resident
            pl.BlockSpec((D_pad, T_pad), lambda b, t: (0, 0)),            # resident
        ],
        out_specs=(
            pl.BlockSpec((_B_BLK, D_pad), lambda b, t: (b, 0)),
            pl.BlockSpec((_B_BLK, T_pad), lambda b, t: (b, 0)),
        ),
        scratch_shapes=[pltpu.VMEM((_B_BLK, Dp_pad), jnp.float32)],
        compiler_params=pltpu.CompilerParams(
            dimension_semantics=("parallel", "arbitrary"),
            vmem_limit_bytes=vmem_limit),
        cost_estimate=cost,
    )(scalars, patches, w_patch_p, b_patch_p, w_proj_p, txt_t)

    return feat[:B, :D], logits[:B, :T]


def clip_forward(image, params, text_features=None, is_multi_label=False):
    """Mirrors CLIPModel.forward (synthetic ViT-style encode_image backbone)."""
    D = params["w_proj"].shape[1]

    if text_features is None:
        txt = jnp.zeros((1, D), jnp.float32)
        feat, _ = _clip_pallas_forward(
            image, params["w_patch"], params["b_patch"], params["w_proj"],
            txt, params["logit_scale"], patch=params["patch"])
        return {"image_feature": feat, "image_feature_pretrained": feat}

    if is_multi_label:
        # torch: stack -> (M, T, D); (B,D)@(M,D,T) -> (M,B,T); transpose(0,1).
        # Fused here: one pallas_call over concatenated (M*T, D) text rows.
        tf_list = [jnp.asarray(tf) for tf in text_features]
        M, T = len(tf_list), tf_list[0].shape[0]
        assert all(tf.shape == tf_list[0].shape for tf in tf_list), (
            "multi-label path requires identical (T, D) per task (torch.stack)")
        txt = jnp.concatenate(tf_list, axis=0)
    else:
        txt = jnp.asarray(text_features)

    feat, logits = _clip_pallas_forward(
        image, params["w_patch"], params["b_patch"], params["w_proj"],
        txt, params["logit_scale"], patch=params["patch"])

    out = {"image_feature": feat, "image_feature_pretrained": feat}
    if is_multi_label:
        out["logits"] = logits.reshape(feat.shape[0], M, T)    # (B, M, T)
    else:
        out["logits"] = logits                                 # (B, T)
    return out


# TODO(synk): init_wise_ft / _merge is a host-side parameter-dict interpolation
# (no runtime hot path); it is not implemented as a kernel.
# TODO(synk): init_text_features relies on an unspecified text encoder; text
# features are taken as precomputed inputs here.


# ----------------------------------------------------------------------------
# Reference (plain JAX, f32) for validation
# ----------------------------------------------------------------------------
def _reference_forward(image, params, text_list):
    patches = _patchify(image, params["patch"])                # (B, P, Dp)
    emb = jnp.einsum("bpd,dw->bpw", patches, params["w_patch"])
    pooled = emb.mean(axis=1) + params["b_patch"].reshape(1, -1)
    feat = pooled @ params["w_proj"]
    img_n = feat / jnp.maximum(
        jnp.linalg.norm(feat, axis=-1, keepdims=True), 1e-12)
    logits = []
    for tf in text_list:
        tn = tf / jnp.maximum(
            jnp.linalg.norm(tf, axis=-1, keepdims=True), 1e-12)
        logits.append(params["logit_scale"] * img_n @ tn.T)
    return feat, logits


# ----------------------------------------------------------------------------
if __name__ == "__main__":
    # Small, PyTorch-consistent shapes (lane-dense feature dims).
    B, C, H, W_img = 2, 3, 16, 16      # image: NCHW
    PATCH = 8                          # -> P = 4 patches, Dp = 192 (pad -> 256)
    WIDTH = 128                        # backbone width
    EMBED = 128                        # CLIP embedding dim
    NUM_TEXT = 8                       # classes per task
    NUM_TASKS = 3                      # multi-label tasks

    key = jax.random.PRNGKey(0)
    k_img, k_wp, k_bp, k_proj, k_txt = jax.random.split(key, 5)

    params = {
        "patch": PATCH,
        "w_patch": jax.random.normal(k_wp, (C * PATCH * PATCH, WIDTH),
                                     jnp.float32) * 0.02,
        "b_patch": jax.random.normal(k_bp, (1, WIDTH), jnp.float32) * 0.02,
        "w_proj": jax.random.normal(k_proj, (WIDTH, EMBED),
                                    jnp.float32) * 0.02,
        "logit_scale": jnp.float32(100.0),
    }

    image = jax.random.normal(k_img, (B, C, H, W_img), jnp.float32)
    text_list = list(jax.random.normal(k_txt, (NUM_TASKS, NUM_TEXT, EMBED),
                                       jnp.float32))

    # Single-task path.
    out = clip_forward(image, params, text_features=text_list[0])
    jax.block_until_ready(out["logits"])

    # Multi-label path (single fused pallas_call for all tasks).
    out_ml = clip_forward(image, params, text_features=text_list,
                          is_multi_label=True)
    jax.block_until_ready(out_ml["logits"])

    # Validate against the plain-JAX f32 reference (patch stream is bf16).
    ref_feat, ref_logits = _reference_forward(image, params, text_list)
    np.testing.assert_allclose(np.asarray(out["image_feature"]),
                               np.asarray(ref_feat), rtol=2e-2, atol=2e-2)
    np.testing.assert_allclose(np.asarray(out["logits"]),
                               np.asarray(ref_logits[0]),
                               rtol=3e-2, atol=3e-1)
    np.testing.assert_allclose(np.asarray(out_ml["logits"]),
                               np.asarray(jnp.stack(ref_logits, axis=1)),
                               rtol=3e-2, atol=3e-1)

    print("KERNEL_OK")
</pallas_src>

<mosaic_0001>
module attributes {stable_mosaic.version = 11 : i64} {
  func.func @_clip_fwd_kernel(%arg0: i32, %arg1: i32, %arg2: memref<2xf32, #tpu.memory_space<smem>>, %arg3: memref<8x16x256xbf16, #tpu.memory_space<vmem>>, %arg4: memref<256x128xf32, #tpu.memory_space<vmem>>, %arg5: memref<1x128xf32, #tpu.memory_space<vmem>>, %arg6: memref<128x128xf32, #tpu.memory_space<vmem>>, %arg7: memref<128x128xf32, #tpu.memory_space<vmem>>, %arg8: memref<8x128xf32, #tpu.memory_space<vmem>>, %arg9: memref<8x128xf32, #tpu.memory_space<vmem>>, %arg10: memref<8x256xf32, #tpu.memory_space<vmem>>) attributes {dimension_semantics = [#tpu.dimension_semantics<parallel>, #tpu.dimension_semantics<arbitrary>], iteration_bounds = array<i64: 1, 1>, scalar_prefetch = 0 : i64, scratch_operands = 1 : i64, tpu.core_type = #tpu.core_type<tc>, window_params = [{transform_indices = @transform_0, window_bounds = array<i64: 2>}, {transform_indices = @transform_1, window_bounds = array<i64: 8, 16, 256>}, {pipeline_mode = #tpu.pipeline_mode<synchronous>, transform_indices = @transform_2, window_bounds = array<i64: 256, 128>}, {pipeline_mode = #tpu.pipeline_mode<synchronous>, transform_indices = @transform_3, window_bounds = array<i64: 1, 128>}, {pipeline_mode = #tpu.pipeline_mode<synchronous>, transform_indices = @transform_4, window_bounds = array<i64: 128, 128>}, {pipeline_mode = #tpu.pipeline_mode<synchronous>, transform_indices = @transform_5, window_bounds = array<i64: 128, 128>}, {transform_indices = @transform_6, window_bounds = array<i64: 8, 128>}, {transform_indices = @transform_7, window_bounds = array<i64: 8, 128>}]} {
    %c0_i32 = arith.constant 0 : i32
    %0 = arith.cmpi eq, %arg1, %c0_i32 : i32
    %1 = arith.extui %0 : i1 to i32
    %c0_i32_0 = arith.constant 0 : i32
    %2 = arith.cmpi ne, %1, %c0_i32_0 : i32
    scf.if %2 {
      %cst_9 = arith.constant 0.000000e+00 : f32
      %12 = vector.broadcast %cst_9 : f32 to vector<8x256xf32>
      %c0_10 = arith.constant 0 : index
      %c0_11 = arith.constant 0 : index
      %13 = vector.load %arg10[%c0_10, %c0_11] : memref<8x256xf32, #tpu.memory_space<vmem>>, vector<8x256xf32>
      tpu.vector_store %arg10[%c0_10, %c0_11], %12 {strides = array<i32>} : memref<8x256xf32, #tpu.memory_space<vmem>>, vector<8x256xf32>,
    } else {
    }
    %c0 = arith.constant 0 : index
    %c0_1 = arith.constant 0 : index
    %3 = vector.load %arg10[%c0, %c0_1] : memref<8x256xf32, #tpu.memory_space<vmem>>, vector<8x256xf32>
    %c0_2 = arith.constant 0 : index
    %c0_3 = arith.constant 0 : index
    %c0_4 = arith.constant 0 : index
    %4 = vector.load %arg3[%c0_2, %c0_3, %c0_4] : memref<8x16x256xbf16, #tpu.memory_space<vmem>>, vector<8x16x256xbf16>
    %5 = arith.extf %4 : vector<8x16x256xbf16> to vector<8x16x256xf32>
    %cst = arith.constant dense<0.000000e+00> : vector<8x256xf32>
    %6 = vector.multi_reduction <add>, %5, %cst [1] : vector<8x16x256xf32> to vector<8x256xf32>
    %7 = arith.addf %3, %6 : vector<8x256xf32>
    %c0_5 = arith.constant 0 : index
    %c0_6 = arith.constant 0 : index
    %8 = vector.load %arg10[%c0_5, %c0_6] : memref<8x256xf32, #tpu.memory_space<vmem>>, vector<8x256xf32>
    tpu.vector_store %arg10[%c0_5, %c0_6], %7 {strides = array<i32>} : memref<8x256xf32, #tpu.memory_space<vmem>>, vector<8x256xf32>,
    %c0_i32_7 = arith.constant 0 : i32
    %9 = arith.cmpi eq, %arg1, %c0_i32_7 : i32
    %10 = arith.extui %9 : i1 to i32
    %c0_i32_8 = arith.constant 0 : i32
    %11 = arith.cmpi ne, %10, %c0_i32_8 : i32
    scf.if %11 {
      %c0_9 = arith.constant 0 : index
      %12 = memref.load %arg2[%c0_9] : memref<2xf32, #tpu.memory_space<smem>>
      %c1 = arith.constant 1 : index
      %13 = memref.load %arg2[%c1] : memref<2xf32, #tpu.memory_space<smem>>
      %c0_10 = arith.constant 0 : index
      %c0_11 = arith.constant 0 : index
      %14 = vector.load %arg10[%c0_10, %c0_11] : memref<8x256xf32, #tpu.memory_space<vmem>>, vector<8x256xf32>
      %15 = vector.broadcast %13 : f32 to vector<8x256xf32>
      %16 = arith.mulf %14, %15 : vector<8x256xf32>
      %c0_12 = arith.constant 0 : index
      %c0_13 = arith.constant 0 : index
      %17 = vector.load %arg4[%c0_12, %c0_13] : memref<256x128xf32, #tpu.memory_space<vmem>>, vector<256x128xf32>
      %cst_14 = arith.constant dense<0.000000e+00> : vector<8x128xf32>
      %18 = tpu.matmul %16, %17, %cst_14 {dimension_numbers = #tpu.dot_dimension_numbers<[1], [0], [0], [1], [0, 0, 1, 1], [], []>} : vector<8x256xf32>, vector<256x128xf32>, vector<8x128xf32> -> vector<8x128xf32>
      %c0_15 = arith.constant 0 : index
      %c0_16 = arith.constant 0 : index
      %19 = vector.load %arg5[%c0_15, %c0_16] : memref<1x128xf32, #tpu.memory_space<vmem>>, vector<1x128xf32>
      %20 = vector.broadcast %19 : vector<1x128xf32> to vector<8x128xf32>
      %21 = arith.addf %18, %20 : vector<8x128xf32>
      %c0_17 = arith.constant 0 : index
      %c0_18 = arith.constant 0 : index
      %22 = vector.load %arg6[%c0_17, %c0_18] : memref<128x128xf32, #tpu.memory_space<vmem>>, vector<128x128xf32>
      %cst_19 = arith.constant dense<0.000000e+00> : vector<8x128xf32>
      %23 = tpu.matmul %21, %22, %cst_19 {dimension_numbers = #tpu.dot_dimension_numbers<[1], [0], [0], [1], [0, 0, 1, 1], [], []>} : vector<8x128xf32>, vector<128x128xf32>, vector<8x128xf32> -> vector<8x128xf32>
      %c0_20 = arith.constant 0 : index
      %c0_21 = arith.constant 0 : index
      %24 = vector.load %arg8[%c0_20, %c0_21] : memref<8x128xf32, #tpu.memory_space<vmem>>, vector<8x128xf32>
      tpu.vector_store %arg8[%c0_20, %c0_21], %23 {strides = array<i32>} : memref<8x128xf32, #tpu.memory_space<vmem>>, vector<8x128xf32>,
      %25 = arith.mulf %23, %23 : vector<8x128xf32>
      %cst_22 = arith.constant dense<0.000000e+00> : vector<8xf32>
      %26 = vector.multi_reduction <add>, %25, %cst_22 [1] : vector<8x128xf32> to vector<8xf32>
      %27 = vector.shape_cast %26 : vector<8xf32> to vector<8x1xf32>
      %cst_23 = arith.constant 1.000000e-24 : f32
      %28 = vector.broadcast %cst_23 : f32 to vector<8x1xf32>
      %29 = arith.maximumf %27, %28 : vector<8x1xf32>
      %30 = math.rsqrt %29 : vector<8x1xf32>
      %31 = vector.broadcast %30 : vector<8x1xf32> to vector<8x128xf32>
      %32 = arith.mulf %23, %31 : vector<8x128xf32>
      %c0_24 = arith.constant 0 : index
      %c0_25 = arith.constant 0 : index
      %33 = vector.load %arg7[%c0_24, %c0_25] : memref<128x128xf32, #tpu.memory_space<vmem>>, vector<128x128xf32>
      %cst_26 = arith.constant dense<0.000000e+00> : vector<8x128xf32>
      %34 = tpu.matmul %32, %33, %cst_26 {dimension_numbers = #tpu.dot_dimension_numbers<[1], [0], [0], [1], [0, 0, 1, 1], [], []>} : vector<8x128xf32>, vector<128x128xf32>, vector<8x128xf32> -> vector<8x128xf32>
      %35 = vector.broadcast %12 : f32 to vector<8x128xf32>
      %36 = arith.mulf %35, %34 : vector<8x128xf32>
      %c0_27 = arith.constant 0 : index
      %c0_28 = arith.constant 0 : index
      %37 = vector.load %arg9[%c0_27, %c0_28] : memref<8x128xf32, #tpu.memory_space<vmem>>, vector<8x128xf32>
      tpu.vector_store %arg9[%c0_27, %c0_28], %36 {strides = array<i32>} : memref<8x128xf32, #tpu.memory_space<vmem>>, vector<8x128xf32>,
    } else {
    }
    return
  }
  func.func @transform_0(%arg0: i32, %arg1: i32) -> i32 {
    %c0_i32 = arith.constant 0 : i32
    %c0_i32_0 = arith.constant 0 : i32
    return %c0_i32 : i32
  }
  func.func @transform_1(%arg0: i32, %arg1: i32) -> (i32, i32, i32) {
    %c0_i32 = arith.constant 0 : i32
    %c0_i32_0 = arith.constant 0 : i32
    return %arg0, %arg1, %c0_i32 : i32, i32, i32
  }
  func.func @transform_2(%arg0: i32, %arg1: i32) -> (i32, i32) {
    %c0_i32 = arith.constant 0 : i32
    %c0_i32_0 = arith.constant 0 : i32
    %c0_i32_1 = arith.constant 0 : i32
    return %c0_i32, %c0_i32_0 : i32, i32
  }
  func.func @transform_3(%arg0: i32, %arg1: i32) -> (i32, i32) {
    %c0_i32 = arith.constant 0 : i32
    %c0_i32_0 = arith.constant 0 : i32
    %c0_i32_1 = arith.constant 0 : i32
    return %c0_i32, %c0_i32_0 : i32, i32
  }
  func.func @transform_4(%arg0: i32, %arg1: i32) -> (i32, i32) {
    %c0_i32 = arith.constant 0 : i32
    %c0_i32_0 = arith.constant 0 : i32
    %c0_i32_1 = arith.constant 0 : i32
    return %c0_i32, %c0_i32_0 : i32, i32
  }
  func.func @transform_5(%arg0: i32, %arg1: i32) -> (i32, i32) {
    %c0_i32 = arith.constant 0 : i32
    %c0_i32_0 = arith.constant 0 : i32
    %c0_i32_1 = arith.constant 0 : i32
    return %c0_i32, %c0_i32_0 : i32, i32
  }
  func.func @transform_6(%arg0: i32, %arg1: i32) -> (i32, i32) {
    %c0_i32 = arith.constant 0 : i32
    %c0_i32_0 = arith.constant 0 : i32
    return %arg0, %c0_i32 : i32, i32
  }
  func.func @transform_7(%arg0: i32, %arg1: i32) -> (i32, i32) {
    %c0_i32 = arith.constant 0 : i32
    %c0_i32_0 = arith.constant 0 : i32
    return %arg0, %c0_i32 : i32, i32
  }
}

</mosaic_0001>

<llo_original>
// kernel: _clip_pallas_forward.1
$region0: #{_clip_pallas_forward.1}
  #allocation0 [shape = 'u32[]', space=smem, size = 0x4, offset = 0x4, fixed_abs, tag = 'smem constant byte address 0x4 - core index']
  #allocation1 [shape = 'u32[144,128]{1,0:T(1,128)}', space=vmem, size = 0x12000, scoped, tag = 'internal scratch']
  #allocation2 [shape = 'f32[8,256]{1,0:T(8,128)}', space=vmem, size = 0x2000, scoped, tag = 'scratch operand']
  %s0 = inlined_call_operand.vmem [shape: f32[2], index: 0, kind: input, shape index: {}]
  %s1 = inlined_call_operand.vmem [shape: bf16[8,16,256], index: 1, kind: input, shape index: {}]
  %s2 = inlined_call_operand.vmem [shape: f32[256,128], index: 2, kind: input, shape index: {}]
  %s3 = inlined_call_operand.vmem [shape: f32[1,128], index: 3, kind: input, shape index: {}]
  %s4 = inlined_call_operand.vmem [shape: f32[128,128], index: 4, kind: input, shape index: {}]
  %s5 = inlined_call_operand.vmem [shape: f32[128,128], index: 5, kind: input, shape index: {}]
  %s6 = inlined_call_operand.vmem [shape: f32[8,128], index: 6, kind: output, shape index: {0}]
  %s7 = inlined_call_operand.vmem [shape: f32[8,128], index: 7, kind: output, shape index: {1}]
  %8 = xla_tuple %s6, %s7
  %s9 = sld [smem:[#allocation0]]
  $region54: #{_clip_pallas_forward.1} parent=0
    _
  %s11 = ssub.s32 1, %s9
  %s12 = scalar_select 0, %s11, %s9
  $region1: #{_clip_pallas_forward.1} parent=0
    #allocation3 [shape = 'u8[512]{0}', space=smem, size = 0x200, scoped, tag = 'input window, operand 0, single buffered']
    #allocation4 [shape = 's32[1]{0}', space=sflag, size = 0x4, scoped, tag = 'scoped memory for _clip_pallas_forward.1']
    %13 = vsyncpa [#allocation4], 0
    // Predicated region
    $region2: #{_clip_pallas_forward.1} parent=1 // pred_check
      _
    $region3: #{_clip_pallas_forward.1} parent=1 // pred_check_branch
      %15 = sbr.rel (0) target = $region5
    $region4: #{_clip_pallas_forward.1} parent=1 // pred_region
      %s17 = ssub.s32 16, 16
      %18 = vsyncadd [#allocation4], %s17
      %s20 = sshll.u32 %s0, 4
      %s21 = int_to_ptr.vmem [resolvable:$true] %s20
      %23 = dma.vmem_to_smem %s21, 16, [#allocation3], [#allocation4]
    $region5: #{_clip_pallas_forward.1} parent=1 // pred_fallthru
      _
    // Predicated region
    $region6: #{_clip_pallas_forward.1} parent=1 // pred_check
      _
    $region7: #{_clip_pallas_forward.1} parent=1 // pred_check_branch
      %25 = sbr.rel (0) target = $region9
    $region8: #{_clip_pallas_forward.1} parent=1 // pred_region
      _
    $region9: #{_clip_pallas_forward.1} parent=1 // pred_fallthru
      _
    // Predicated region
    $region10: #{_clip_pallas_forward.1} parent=1 // pred_check
      _
    $region11: #{_clip_pallas_forward.1} parent=1 // pred_check_branch
      %27 = sbr.rel (0) target = $region13
    $region12: #{_clip_pallas_forward.1} parent=1 // pred_region
      _
    $region13: #{_clip_pallas_forward.1} parent=1 // pred_fallthru
      _
    // Predicated region
    $region14: #{_clip_pallas_forward.1} parent=1 // pred_check
      _
    $region15: #{_clip_pallas_forward.1} parent=1 // pred_check_branch
      %29 = sbr.rel (0) target = $region17
    $region16: #{_clip_pallas_forward.1} parent=1 // pred_region
      _
    $region17: #{_clip_pallas_forward.1} parent=1 // pred_fallthru
      _
    // Predicated region
    $region18: #{_clip_pallas_forward.1} parent=1 // pred_check
      _
    $region19: #{_clip_pallas_forward.1} parent=1 // pred_check_branch
      %31 = sbr.rel (0) target = $region21
    $region20: #{_clip_pallas_forward.1} parent=1 // pred_region
      _
    $region21: #{_clip_pallas_forward.1} parent=1 // pred_fallthru
      _
    // Predicated region
    $region22: #{_clip_pallas_forward.1} parent=1 // pred_check
      _
    $region23: #{_clip_pallas_forward.1} parent=1 // pred_check_branch
      %33 = sbr.rel (0) target = $region25
    $region24: #{_clip_pallas_forward.1} parent=1 // pred_region
      _
    $region25: #{_clip_pallas_forward.1} parent=1 // pred_fallthru
      _
    // Predicated region
    $region26: #{_clip_pallas_forward.1} parent=1 // pred_check
      _
    $region27: #{_clip_pallas_forward.1} parent=1 // pred_check_branch
      %35 = sbr.rel (0) target = $region29
    $region28: #{_clip_pallas_forward.1} parent=1 // pred_region
      %36 = dma.done [#allocation4], 16
    $region29: #{_clip_pallas_forward.1} parent=1 // pred_fallthru
      _
    %37 = sfence
    %p38 = scmp.eq.s32.totalorder 0, 0
    // Predicated region
    $region30: #{_clip_pallas_forward.1} parent=1 // pred_check
      %p39 = pneg %p38
    $region31: #{_clip_pallas_forward.1} parent=1 // pred_check_branch
      %41 = sbr.rel (%p39) target = $region33
    $region32: #{_clip_pallas_forward.1} parent=1 // pred_region
      %42 = vst [vmem:[#allocation2] sm:$0xff] 0.0
      %43 = vst [vmem:[#allocation2 + $0x8] sm:$0xff] 0.0
    $region33: #{_clip_pallas_forward.1} parent=1 // pred_fallthru
      _
    %v44 = vld [vmem:[#allocation2] sm:$0xff]
    %v45 = vld [vmem:[#allocation2 + $0x8] sm:$0xff]
    %v46 = vld [vmem:[%s1] sm:$0xff]
    %v47 = vld [vmem:[%s1 + $0x8] sm:$0xff]
    %v48 = vld [vmem:[%s1 + $0x10] sm:$0xff]
    %v49 = vld [vmem:[%s1 + $0x18] sm:$0xff]
    %v50 = vld [vmem:[%s1 + $0x20] sm:$0xff]
    %v51 = vld [vmem:[%s1 + $0x28] sm:$0xff]
    %v52 = vld [vmem:[%s1 + $0x30] sm:$0xff]
    %v53 = vld [vmem:[%s1 + $0x38] sm:$0xff]
    %v54 = vld [vmem:[%s1 + $0x40] sm:$0xff]
    %v55 = vld [vmem:[%s1 + $0x48] sm:$0xff]
    %v56 = vld [vmem:[%s1 + $0x50] sm:$0xff]
    %v57 = vld [vmem:[%s1 + $0x58] sm:$0xff]
    %v58 = vld [vmem:[%s1 + $0x60] sm:$0xff]
    %v59 = vld [vmem:[%s1 + $0x68] sm:$0xff]
    %v60 = vld [vmem:[%s1 + $0x70] sm:$0xff]
    %v61 = vld [vmem:[%s1 + $0x78] sm:$0xff]
    %v62 = vunpack.c.l.bf16 %v46
    %v63 = vunpack.c.h.bf16 %v46
    %v64 = vunpack.c.l.bf16 %v47
    %v65 = vunpack.c.h.bf16 %v47
    %v66 = vunpack.c.l.bf16 %v48
    %v67 = vunpack.c.h.bf16 %v48
    %v68 = vunpack.c.l.bf16 %v49
    %v69 = vunpack.c.h.bf16 %v49
    %v70 = vunpack.c.l.bf16 %v50
    %v71 = vunpack.c.h.bf16 %v50
    %v72 = vunpack.c.l.bf16 %v51
    %v73 = vunpack.c.h.bf16 %v51
    %v74 = vunpack.c.l.bf16 %v52
    %v75 = vunpack.c.h.bf16 %v52
    %v76 = vunpack.c.l.bf16 %v53
    %v77 = vunpack.c.h.bf16 %v53
    %v78 = vunpack.c.l.bf16 %v54
    %v79 = vunpack.c.h.bf16 %v54
    %v80 = vunpack.c.l.bf16 %v55
    %v81 = vunpack.c.h.bf16 %v55
    %v82 = vunpack.c.l.bf16 %v56
    %v83 = vunpack.c.h.bf16 %v56
    %v84 = vunpack.c.l.bf16 %v57
    %v85 = vunpack.c.h.bf16 %v57
    %v86 = vunpack.c.l.bf16 %v58
    %v87 = vunpack.c.h.bf16 %v58
    %v88 = vunpack.c.l.bf16 %v59
    %v89 = vunpack.c.h.bf16 %v59
    %v90 = vunpack.c.l.bf16 %v60
    %v91 = vunpack.c.h.bf16 %v60
    %v92 = vunpack.c.l.bf16 %v61
    %v93 = vunpack.c.h.bf16 %v61
    %v94 = vadd.f32 %v62, %v64
    %v95 = vrot.slane %v94, 4
    %v96 = vadd.f32 %v94, %v95
    %v97 = vrot.slane %v96, 2
    %v98 = vadd.f32 %v96, %v97
    %v99 = vrot.slane %v98, 1
    %v100 = vadd.f32 %v98, %v99
    %v101 = vadd.f32 %v63, %v65
    %v102 = vrot.slane %v101, 4
    %v103 = vadd.f32 %v101, %v102
    %v104 = vrot.slane %v103, 2
    %v105 = vadd.f32 %v103, %v104
    %v106 = vrot.slane %v105, 1
    %v107 = vadd.f32 %v105, %v106
    %v108 = vadd.f32 %v66, %v68
    %v109 = vrot.slane %v108, 4
    %v110 = vadd.f32 %v108, %v109
    %v111 = vrot.slane %v110, 2
    %v112 = vadd.f32 %v110, %v111
    %v113 = vrot.slane %v112, 1
    %v114 = vadd.f32 %v112, %v113
    %v115 = vadd.f32 %v67, %v69
    %v116 = vrot.slane %v115, 4
    %v117 = vadd.f32 %v115, %v116
    %v118 = vrot.slane %v117, 2
    %v119 = vadd.f32 %v117, %v118
    %v120 = vrot.slane %v119, 1
    %v121 = vadd.f32 %v119, %v120
    %v122 = vadd.f32 %v70, %v72
    %v123 = vrot.slane %v122, 4
    %v124 = vadd.f32 %v122, %v123
    %v125 = vrot.slane %v124, 2
    %v126 = vadd.f32 %v124, %v125
    %v127 = vrot.slane %v126, 1
    %v128 = vadd.f32 %v126, %v127
    %v129 = vadd.f32 %v71, %v73
    %v130 = vrot.slane %v129, 4
    %v131 = vadd.f32 %v129, %v130
    %v132 = vrot.slane %v131, 2
    %v133 = vadd.f32 %v131, %v132
    %v134 = vrot.slane %v133, 1
    %v135 = vadd.f32 %v133, %v134
    %v136 = vadd.f32 %v74, %v76
    %v137 = vrot.slane %v136, 4
    %v138 = vadd.f32 %v136, %v137
    %v139 = vrot.slane %v138, 2
    %v140 = vadd.f32 %v138, %v139
    %v141 = vrot.slane %v140, 1
    %v142 = vadd.f32 %v140, %v141
    %v143 = vadd.f32 %v75, %v77
    %v144 = vrot.slane %v143, 4
    %v145 = vadd.f32 %v143, %v144
    %v146 = vrot.slane %v145, 2
    %v147 = vadd.f32 %v145, %v146
    %v148 = vrot.slane %v147, 1
    %v149 = vadd.f32 %v147, %v148
    %v150 = vadd.f32 %v78, %v80
    %v151 = vrot.slane %v150, 4
    %v152 = vadd.f32 %v150, %v151
    %v153 = vrot.slane %v152, 2
    %v154 = vadd.f32 %v152, %v153
    %v155 = vrot.slane %v154, 1
    %v156 = vadd.f32 %v154, %v155
    %v157 = vadd.f32 %v79, %v81
    %v158 = vrot.slane %v157, 4
    %v159 = vadd.f32 %v157, %v158
    %v160 = vrot.slane %v159, 2
    %v161 = vadd.f32 %v159, %v160
    %v162 = vrot.slane %v161, 1
    %v163 = vadd.f32 %v161, %v162
    %v164 = vadd.f32 %v82, %v84
    %v165 = vrot.slane %v164, 4
    %v166 = vadd.f32 %v164, %v165
    %v167 = vrot.slane %v166, 2
    %v168 = vadd.f32 %v166, %v167
    %v169 = vrot.slane %v168, 1
    %v170 = vadd.f32 %v168, %v169
    %v171 = vadd.f32 %v83, %v85
    %v172 = vrot.slane %v171, 4
    %v173 = vadd.f32 %v171, %v172
    %v174 = vrot.slane %v173, 2
    %v175 = vadd.f32 %v173, %v174
    %v176 = vrot.slane %v175, 1
    %v177 = vadd.f32 %v175, %v176
    %v178 = vadd.f32 %v86, %v88
    %v179 = vrot.slane %v178, 4
    %v180 = vadd.f32 %v178, %v179
    %v181 = vrot.slane %v180, 2
    %v182 = vadd.f32 %v180, %v181
    %v183 = vrot.slane %v182, 1
    %v184 = vadd.f32 %v182, %v183
    %v185 = vadd.f32 %v87, %v89
    %v186 = vrot.slane %v185, 4
    %v187 = vadd.f32 %v185, %v186
    %v188 = vrot.slane %v187, 2
    %v189 = vadd.f32 %v187, %v188
    %v190 = vrot.slane %v189, 1
    %v191 = vadd.f32 %v189, %v190
    %v192 = vadd.f32 %v90, %v92
    %v193 = vrot.slane %v192, 4
    %v194 = vadd.f32 %v192, %v193
    %v195 = vrot.slane %v194, 2
    %v196 = vadd.f32 %v194, %v195
    %v197 = vrot.slane %v196, 1
    %v198 = vadd.f32 %v196, %v197
    %v199 = vadd.f32 %v91, %v93
    %v200 = vrot.slane %v199, 4
    %v201 = vadd.f32 %v199, %v200
    %v202 = vrot.slane %v201, 2
    %v203 = vadd.f32 %v201, %v202
    %v204 = vrot.slane %v203, 1
    %v205 = vadd.f32 %v203, %v204
    %vm222 = vcmask 1041409
    %v223 = vsel %vm222, %v114, %v100
    %vm224 = vcmask 1042434
    %v225 = vsel %vm224, %v128, %v223
    %vm226 = vcmask 1043459
    %v227 = vsel %vm226, %v142, %v225
    %vm228 = vcmask 1044484
    %v229 = vsel %vm228, %v156, %v227
    %vm230 = vcmask 1045509
    %v231 = vsel %vm230, %v170, %v229
    %vm232 = vcmask 1046534
    %v233 = vsel %vm232, %v184, %v231
    %vm234 = vcmask 1047559
    %v235 = vsel %vm234, %v198, %v233
    %v236 = vsel %vm222, %v121, %v107
    %v237 = vsel %vm224, %v135, %v236
    %v238 = vsel %vm226, %v149, %v237
    %v239 = vsel %vm228, %v163, %v238
    %v240 = vsel %vm230, %v177, %v239
    %v241 = vsel %vm232, %v191, %v240
    %v242 = vsel %vm234, %v205, %v241
    %v245 = vadd.f32 %v44, %v235
    %v246 = vadd.f32 %v45, %v242
    %247 = vst [vmem:[#allocation2] sm:$0xff] %v245
    %248 = vst [vmem:[#allocation2 + $0x8] sm:$0xff] %v246
    // Predicated region
    $region34: #{_clip_pallas_forward.1} parent=1 // pred_check
      %p249 = pneg %p38
    $region35: #{_clip_pallas_forward.1} parent=1 // pred_check_branch
      %251 = sbr.rel (%p249) target = $region37
    $region36: #{_clip_pallas_forward.1} parent=1 // pred_region
      %s252 = sld [smem:[#allocation3]]
      %s253 = sld [smem:[#allocation3 + $0x1]]
      %v254 = vld [vmem:[#allocation2] sm:$0xff]
      %v255 = vld [vmem:[#allocation2 + $0x8] sm:$0xff]
      %v256 = vstv %s253
      %v257 = vmul.f32 %v254, %v256
      %v258 = vmul.f32 %v255, %v256
      %v259 = vld [vmem:[%s2] sm:$0xff]
      %v260 = vld [vmem:[%s2 + $0x8] sm:$0xff]
      %v261 = vld [vmem:[%s2 + $0x10] sm:$0xff]
      %v262 = vld [vmem:[%s2 + $0x18] sm:$0xff]
      %v263 = vld [vmem:[%s2 + $0x20] sm:$0xff]
      %v264 = vld [vmem:[%s2 + $0x28] sm:$0xff]
      %v265 = vld [vmem:[%s2 + $0x30] sm:$0xff]
      %v266 = vld [vmem:[%s2 + $0x38] sm:$0xff]
      %v267 = vld [vmem:[%s2 + $0x40] sm:$0xff]
      %v268 = vld [vmem:[%s2 + $0x48] sm:$0xff]
      %v269 = vld [vmem:[%s2 + $0x50] sm:$0xff]
      %v270 = vld [vmem:[%s2 + $0x58] sm:$0xff]
      %v271 = vld [vmem:[%s2 + $0x60] sm:$0xff]
      %v272 = vld [vmem:[%s2 + $0x68] sm:$0xff]
      %v273 = vld [vmem:[%s2 + $0x70] sm:$0xff]
      %v274 = vld [vmem:[%s2 + $0x78] sm:$0xff]
      %v275 = vld [vmem:[%s2 + $0x80] sm:$0xff]
      %v276 = vld [vmem:[%s2 + $0x88] sm:$0xff]
      %v277 = vld [vmem:[%s2 + $0x90] sm:$0xff]
      %v278 = vld [vmem:[%s2 + $0x98] sm:$0xff]
      %v279 = vld [vmem:[%s2 + $0xa0] sm:$0xff]
      %v280 = vld [vmem:[%s2 + $0xa8] sm:$0xff]
      %v281 = vld [vmem:[%s2 + $0xb0] sm:$0xff]
      %v282 = vld [vmem:[%s2 + $0xb8] sm:$0xff]
      %v283 = vld [vmem:[%s2 + $0xc0] sm:$0xff]
      %v284 = vld [vmem:[%s2 + $0xc8] sm:$0xff]
      %v285 = vld [vmem:[%s2 + $0xd0] sm:$0xff]
      %v286 = vld [vmem:[%s2 + $0xd8] sm:$0xff]
      %v287 = vld [vmem:[%s2 + $0xe0] sm:$0xff]
      %v288 = vld [vmem:[%s2 + $0xe8] sm:$0xff]
      %v289 = vld [vmem:[%s2 + $0xf0] sm:$0xff]
      %v290 = vld [vmem:[%s2 + $0xf8] sm:$0xff]
      %v291 = vld [vmem:[%s3] sm:$0x1]
      %v293 = vlaneseq
      %v294 = vshrl.u32 %v293, 7
      %v295 = vsub.s32 0, %v294
      %v296 = vrot.slane %v291, %v295
      %298 = vmatprep.subr.mxu0 0.0
      %299 = vmatpush1.msra.mxu0 %v274
      %300 = vmatprep.subr.mxu0 0.0
      %301 = vmatpush1.msra.mxu0 %v273
      %302 = vmatprep.subr.mxu0 0.0
      %303 = vmatpush1.msra.mxu0 %v272
      %304 = vmatprep.subr.mxu0 0.0
      %305 = vmatpush1.msra.mxu0 %v271
      %306 = vmatprep.subr.mxu0 0.0
      %307 = vmatpush1.msra.mxu0 %v270
      %308 = vmatprep.subr.mxu0 0.0
      %309 = vmatpush1.msra.mxu0 %v269
      %310 = vmatprep.subr.mxu0 0.0
      %311 = vmatpush1.msra.mxu0 %v268
      %312 = vmatprep.subr.mxu0 0.0
      %313 = vmatpush1.msra.mxu0 %v267
      %314 = vmatprep.subr.mxu0 0.0
      %315 = vmatpush1.msra.mxu0 %v266
      %316 = vmatprep.subr.mxu0 0.0
      %317 = vmatpush1.msra.mxu0 %v265
      %318 = vmatprep.subr.mxu0 0.0
      %319 = vmatpush1.msra.mxu0 %v264
      %320 = vmatprep.subr.mxu0 0.0
      %321 = vmatpush1.msra.mxu0 %v263
      %322 = vmatprep.subr.mxu0 0.0
      %323 = vmatpush1.msra.mxu0 %v262
      %324 = vmatprep.subr.mxu0 0.0
      %325 = vmatpush1.msra.mxu0 %v261
      %326 = vmatprep.subr.mxu0 0.0
      %327 = vmatpush1.msra.mxu0 %v260
      %328 = vmatprep.subr.mxu0 0.0
      %329 = vmatpush1.msra.mxu0 %v259
      %330 = vmatprep.subr.mxu0 0.0
      %331 = vmatpush2.msra.mxu0 %v290
      %332 = vmatprep.subr.mxu0 0.0
      %333 = vmatpush2.msra.mxu0 %v289
      %334 = vmatprep.subr.mxu0 0.0
      %335 = vmatpush2.msra.mxu0 %v288
      %336 = vmatprep.subr.mxu0 0.0
      %337 = vmatpush2.msra.mxu0 %v287
      %338 = vmatprep.subr.mxu0 0.0
      %339 = vmatpush2.msra.mxu0 %v286
      %340 = vmatprep.subr.mxu0 0.0
      %341 = vmatpush2.msra.mxu0 %v285
      %342 = vmatprep.subr.mxu0 0.0
      %343 = vmatpush2.msra.mxu0 %v284
      %344 = vmatprep.subr.mxu0 0.0
      %345 = vmatpush2.msra.mxu0 %v283
      %346 = vmatprep.subr.mxu0 0.0
      %347 = vmatpush2.msra.mxu0 %v282
      %348 = vmatprep.subr.mxu0 0.0
      %349 = vmatpush2.msra.mxu0 %v281
      %350 = vmatprep.subr.mxu0 0.0
      %351 = vmatpush2.msra.mxu0 %v280
      %352 = vmatprep.subr.mxu0 0.0
      %353 = vmatpush2.msra.mxu0 %v279
      %354 = vmatprep.subr.mxu0 0.0
      %355 = vmatpush2.msra.mxu0 %v278
      %356 = vmatprep.subr.mxu0 0.0
      %357 = vmatpush2.msra.mxu0 %v277
      %358 = vmatprep.subr.mxu0 0.0
      %359 = vmatpush2.msra.mxu0 %v276
      %360 = vmatprep.subr.mxu0 0.0
      %361 = vmatpush2.msra.mxu0 %v275
      %362 = vmatprep.mubr.f32.mxu0 %v258
      %363 = vmatmul.mubr.f32.gmra.mxu0 %v257
      %v364 = vpop.f32.mrf.mxu0
      %v365 = vadd.f32 %v296, %v364
      %v366 = vpop.f32.mrf.mxu0
      %367 = vdwg.mxu0
      %v368 = vld [vmem:[%s4] sm:$0xff]
      %v369 = vld [vmem:[%s4 + $0x8] sm:$0xff]
      %v370 = vld [vmem:[%s4 + $0x10] sm:$0xff]
      %v371 = vld [vmem:[%s4 + $0x18] sm:$0xff]
      %v372 = vld [vmem:[%s4 + $0x20] sm:$0xff]
      %v373 = vld [vmem:[%s4 + $0x28] sm:$0xff]
      %v374 = vld [vmem:[%s4 + $0x30] sm:$0xff]
      %v375 = vld [vmem:[%s4 + $0x38] sm:$0xff]
      %v376 = vld [vmem:[%s4 + $0x40] sm:$0xff]
      %v377 = vld [vmem:[%s4 + $0x48] sm:$0xff]
      %v378 = vld [vmem:[%s4 + $0x50] sm:$0xff]
      %v379 = vld [vmem:[%s4 + $0x58] sm:$0xff]
      %v380 = vld [vmem:[%s4 + $0x60] sm:$0xff]
      %v381 = vld [vmem:[%s4 + $0x68] sm:$0xff]
      %v382 = vld [vmem:[%s4 + $0x70] sm:$0xff]
      %v383 = vld [vmem:[%s4 + $0x78] sm:$0xff]
      %384 = vmatprep.subr.mxu0 0.0
      %385 = vmatpush1.msra.mxu0 %v383
      %386 = vmatprep.subr.mxu0 0.0
      %387 = vmatpush1.msra.mxu0 %v382
      %388 = vmatprep.subr.mxu0 0.0
      %389 = vmatpush1.msra.mxu0 %v381
      %390 = vmatprep.subr.mxu0 0.0
      %391 = vmatpush1.msra.mxu0 %v380
      %392 = vmatprep.subr.mxu0 0.0
      %393 = vmatpush1.msra.mxu0 %v379
      %394 = vmatprep.subr.mxu0 0.0
      %395 = vmatpush1.msra.mxu0 %v378
      %396 = vmatprep.subr.mxu0 0.0
      %397 = vmatpush1.msra.mxu0 %v377
      %398 = vmatprep.subr.mxu0 0.0
      %399 = vmatpush1.msra.mxu0 %v376
      %400 = vmatprep.subr.mxu0 0.0
      %401 = vmatpush1.msra.mxu0 %v375
      %402 = vmatprep.subr.mxu0 0.0
      %403 = vmatpush1.msra.mxu0 %v374
      %404 = vmatprep.subr.mxu0 0.0
      %405 = vmatpush1.msra.mxu0 %v373
      %406 = vmatprep.subr.mxu0 0.0
      %407 = vmatpush1.msra.mxu0 %v372
      %408 = vmatprep.subr.mxu0 0.0
      %409 = vmatpush1.msra.mxu0 %v371
      %410 = vmatprep.subr.mxu0 0.0
      %411 = vmatpush1.msra.mxu0 %v370
      %412 = vmatprep.subr.mxu0 0.0
      %413 = vmatpush1.msra.mxu0 %v369
      %414 = vmatprep.subr.mxu0 0.0
      %415 = vmatpush1.msra.mxu0 %v368
      %416 = vmatprep.subr.mxu0 0.0
      %417 = vmatpush2.msra.mxu0 0.0
      %418 = vmatprep.subr.mxu0 0.0
      %419 = vmatpush2.msra.mxu0 0.0
      %420 = vmatprep.subr.mxu0 0.0
      %421 = vmatpush2.msra.mxu0 0.0
      %422 = vmatprep.subr.mxu0 0.0
      %423 = vmatpush2.msra.mxu0 0.0
      %424 = vmatprep.subr.mxu0 0.0
      %425 = vmatpush2.msra.mxu0 0.0
      %426 = vmatprep.subr.mxu0 0.0
      %427 = vmatpush2.msra.mxu0 0.0
      %428 = vmatprep.subr.mxu0 0.0
      %429 = vmatpush2.msra.mxu0 0.0
      %430 = vmatprep.subr.mxu0 0.0
      %431 = vmatpush2.msra.mxu0 0.0
      %432 = vmatprep.subr.mxu0 0.0
      %433 = vmatpush2.msra.mxu0 0.0
      %434 = vmatprep.subr.mxu0 0.0
      %435 = vmatpush2.msra.mxu0 0.0
      %436 = vmatprep.subr.mxu0 0.0
      %437 = vmatpush2.msra.mxu0 0.0
      %438 = vmatprep.subr.mxu0 0.0
      %439 = vmatpush2.msra.mxu0 0.0
      %440 = vmatprep.subr.mxu0 0.0
      %441 = vmatpush2.msra.mxu0 0.0
      %442 = vmatprep.subr.mxu0 0.0
      %443 = vmatpush2.msra.mxu0 0.0
      %444 = vmatprep.subr.mxu0 0.0
      %445 = vmatpush2.msra.mxu0 0.0
      %446 = vmatprep.subr.mxu0 0.0
      %447 = vmatpush2.msra.mxu0 0.0
      %448 = vmatprep.mubr.f32.mxu0 0.0
      %449 = vmatmul.mubr.f32.gmra.mxu0 %v365
      %v450 = vpop.f32.mrf.mxu0
      %v451 = vadd.f32 0.0, %v450
      %v452 = vpop.f32.mrf.mxu0
      %453 = vdwg.mxu0
      %454 = vst [vmem:[%s6] sm:$0xff] %v451
      %v455 = vmul.f32 %v451, %v451
      %456 = vadd.xlane.f32.xlu0 %v455
      %v457 = vpop.xlane.xlu0 %456
      %v458 = vmax.f32 %v457, 1e-24
      %v459 = vrsqrt.pop %v458
      %v460 = vmul.f32 %v451, %v459
      %v461 = vld [vmem:[%s5] sm:$0xff]
      %v462 = vld [vmem:[%s5 + $0x8] sm:$0xff]
      %v463 = vld [vmem:[%s5 + $0x10] sm:$0xff]
      %v464 = vld [vmem:[%s5 + $0x18] sm:$0xff]
      %v465 = vld [vmem:[%s5 + $0x20] sm:$0xff]
      %v466 = vld [vmem:[%s5 + $0x28] sm:$0xff]
      %v467 = vld [vmem:[%s5 + $0x30] sm:$0xff]
      %v468 = vld [vmem:[%s5 + $0x38] sm:$0xff]
      %v469 = vld [vmem:[%s5 + $0x40] sm:$0xff]
      %v470 = vld [vmem:[%s5 + $0x48] sm:$0xff]
      %v471 = vld [vmem:[%s5 + $0x50] sm:$0xff]
      %v472 = vld [vmem:[%s5 + $0x58] sm:$0xff]
      %v473 = vld [vmem:[%s5 + $0x60] sm:$0xff]
      %v474 = vld [vmem:[%s5 + $0x68] sm:$0xff]
      %v475 = vld [vmem:[%s5 + $0x70] sm:$0xff]
      %v476 = vld [vmem:[%s5 + $0x78] sm:$0xff]
      %477 = vmatprep.subr.mxu0 0.0
      %478 = vmatpush1.msra.mxu0 %v476
      %479 = vmatprep.subr.mxu0 0.0
      %480 = vmatpush1.msra.mxu0 %v475
      %481 = vmatprep.subr.mxu0 0.0
      %482 = vmatpush1.msra.mxu0 %v474
      %483 = vmatprep.subr.mxu0 0.0
      %484 = vmatpush1.msra.mxu0 %v473
      %485 = vmatprep.subr.mxu0 0.0
      %486 = vmatpush1.msra.mxu0 %v472
      %487 = vmatprep.subr.mxu0 0.0
      %488 = vmatpush1.msra.mxu0 %v471
      %489 = vmatprep.subr.mxu0 0.0
      %490 = vmatpush1.msra.mxu0 %v470
      %491 = vmatprep.subr.mxu0 0.0
      %492 = vmatpush1.msra.mxu0 %v469
      %493 = vmatprep.subr.mxu0 0.0
      %494 = vmatpush1.msra.mxu0 %v468
      %495 = vmatprep.subr.mxu0 0.0
      %496 = vmatpush1.msra.mxu0 %v467
      %497 = vmatprep.subr.mxu0 0.0
      %498 = vmatpush1.msra.mxu0 %v466
      %499 = vmatprep.subr.mxu0 0.0
      %500 = vmatpush1.msra.mxu0 %v465
      %501 = vmatprep.subr.mxu0 0.0
      %502 = vmatpush1.msra.mxu0 %v464
      %503 = vmatprep.subr.mxu0 0.0
      %504 = vmatpush1.msra.mxu0 %v463
      %505 = vmatprep.subr.mxu0 0.0
      %506 = vmatpush1.msra.mxu0 %v462
      %507 = vmatprep.subr.mxu0 0.0
      %508 = vmatpush1.msra.mxu0 %v461
      %509 = vmatprep.subr.mxu0 0.0
      %510 = vmatpush2.msra.mxu0 0.0
      %511 = vmatprep.subr.mxu0 0.0
      %512 = vmatpush2.msra.mxu0 0.0
      %513 = vmatprep.subr.mxu0 0.0
      %514 = vmatpush2.msra.mxu0 0.0
      %515 = vmatprep.subr.mxu0 0.0
      %516 = vmatpush2.msra.mxu0 0.0
      %517 = vmatprep.subr.mxu0 0.0
      %518 = vmatpush2.msra.mxu0 0.0
      %519 = vmatprep.subr.mxu0 0.0
      %520 = vmatpush2.msra.mxu0 0.0
      %521 = vmatprep.subr.mxu0 0.0
      %522 = vmatpush2.msra.mxu0 0.0
      %523 = vmatprep.subr.mxu0 0.0
      %524 = vmatpush2.msra.mxu0 0.0
      %525 = vmatprep.subr.mxu0 0.0
      %526 = vmatpush2.msra.mxu0 0.0
      %527 = vmatprep.subr.mxu0 0.0
      %528 = vmatpush2.msra.mxu0 0.0
      %529 = vmatprep.subr.mxu0 0.0
      %530 = vmatpush2.msra.mxu0 0.0
      %531 = vmatprep.subr.mxu0 0.0
      %532 = vmatpush2.msra.mxu0 0.0
      %533 = vmatprep.subr.mxu0 0.0
      %534 = vmatpush2.msra.mxu0 0.0
      %535 = vmatprep.subr.mxu0 0.0
      %536 = vmatpush2.msra.mxu0 0.0
      %537 = vmatprep.subr.mxu0 0.0
      %538 = vmatpush2.msra.mxu0 0.0
      %539 = vmatprep.subr.mxu0 0.0
      %540 = vmatpush2.msra.mxu0 0.0
      %541 = vmatprep.mubr.f32.mxu0 0.0
      %542 = vmatmul.mubr.f32.gmra.mxu0 %v460
      %v543 = vpop.f32.mrf.mxu0
      %v544 = vadd.f32 0.0, %v543
      %v545 = vpop.f32.mrf.mxu0
      %546 = vdwg.mxu0
      %v547 = vstv %s252
      %v548 = vmul.f32 %v547, %v544
      %549 = vst [vmem:[%s7] sm:$0xff] %v548
    $region37: #{_clip_pallas_forward.1} parent=1 // pred_fallthru
      _
    // Predicated region
    $region38: #{_clip_pallas_forward.1} parent=1 // pred_check
      _
    $region39: #{_clip_pallas_forward.1} parent=1 // pred_check_branch
      %551 = sbr.rel (0) target = $region41
    $region40: #{_clip_pallas_forward.1} parent=1 // pred_region
      _
    $region41: #{_clip_pallas_forward.1} parent=1 // pred_fallthru
      _
    // Predicated region
    $region42: #{_clip_pallas_forward.1} parent=1 // pred_check
      _
    $region43: #{_clip_pallas_forward.1} parent=1 // pred_check_branch
      %553 = sbr.rel (0) target = $region45
    $region44: #{_clip_pallas_forward.1} parent=1 // pred_region
      _
    $region45: #{_clip_pallas_forward.1} parent=1 // pred_fallthru
      _
    // Predicated region
    $region46: #{_clip_pallas_forward.1} parent=1 // pred_check
      _
    $region47: #{_clip_pallas_forward.1} parent=1 // pred_check_branch
      %555 = sbr.rel (0) target = $region49
    $region48: #{_clip_pallas_forward.1} parent=1 // pred_region
      _
    $region49: #{_clip_pallas_forward.1} parent=1 // pred_fallthru
      _
    // Predicated region
    $region50: #{_clip_pallas_forward.1} parent=1 // pred_check
      _
    $region51: #{_clip_pallas_forward.1} parent=1 // pred_check_branch
      %557 = sbr.rel (0) target = $region53
    $region52: #{_clip_pallas_forward.1} parent=1 // pred_region
      _
    $region53: #{_clip_pallas_forward.1} parent=1 // pred_fallthru
      _
    %558 = vsyncpa [#allocation4], 1

</llo_original>
